<compile_context>
chip_gen: v7x
topology: tpu7x:2x2x1
jax: 0.10.0
libtpu: 0.0.40
codegen_flags: <defaults>
</compile_context>

<pallas_src>
import math
import functools

import jax
import jax.numpy as jnp
from jax.experimental import pallas as pl
from jax.experimental.pallas import tpu as pltpu

# SNNParameters / LIParameters are not given in the reference source; use
# deterministic synthetic constants consistent with a leaky integrator.
TAU_MEM = 0.9   # sp.tau_mem
V_LEAK = 0.0    # initial membrane potential (sp.v_leak)


def _round_up(x: int, m: int) -> int:
    return ((x + m - 1) // m) * m


def _pad2(a, rows: int, cols: int):
    pr, pc = rows - a.shape[0], cols - a.shape[1]
    if pr == 0 and pc == 0:
        return a
    return jnp.pad(a, ((0, pr), (0, pc)))


def _make_li_kernel(tau_mem: float):
    def li_linear_kernel(x_ref, w_ref, b_ref, v_ref, v_out_ref, i_out_ref, acc_ref):
        k = pl.program_id(2)

        @pl.when(k == 0)
        def _init():
            acc_ref[...] = jnp.zeros_like(acc_ref)

        # x: (tm, tk), w: (tk, tn) lane-dense RHS -> MXU, f32 accumulation.
        acc_ref[...] += jnp.dot(x_ref[...], w_ref[...],
                                preferred_element_type=jnp.float32)

        @pl.when(k == pl.num_programs(2) - 1)
        def _finalize():
            i_new = acc_ref[...]                                 # f32 (tm, tn)
            v_new = (tau_mem * v_ref[...].astype(jnp.float32)
                     + i_new
                     + b_ref[...].astype(jnp.float32))           # bias (1, tn) broadcasts
            i_out_ref[...] = i_new.astype(i_out_ref.dtype)
            v_out_ref[...] = v_new.astype(v_out_ref.dtype)

    return li_linear_kernel


def li_linear_cell(x, weights, bias, v_state, *, tau_mem=TAU_MEM,
                   tm=256, tn=256, tk=512, compute_dtype=None):
    """One forward step of LILinearCell.

    x:       (B, input_size)
    weights: (hidden, input_size)   (PyTorch linear layout)
    bias:    (hidden,)
    v_state: (B, hidden)            previous membrane potential
    compute_dtype: optional dtype for the matmul operands (e.g. jnp.bfloat16 on
                   v6e/v7x); accumulation and the leak update stay in f32.

    Returns (v_new, (v_new, i_new)) matching (output, LIState) of the module.
    """
    B, K = x.shape
    H, K_w = weights.shape
    assert K_w == K, "weights must be (hidden, input_size)"

    out_dtype = x.dtype
    in_dtype = jnp.dtype(compute_dtype) if compute_dtype is not None else jnp.dtype(x.dtype)

    # Tile sizes: (8, 128)-aligned, never larger than the padded problem.
    tm = min(tm, _round_up(B, 8))
    tn = min(tn, _round_up(H, 128))
    tk = min(tk, _round_up(K, 128))

    B_p, H_p, K_p = _round_up(B, tm), _round_up(H, tn), _round_up(K, tk)

    # Pre-transposed, lane-dense RHS (In, H): no in-kernel transpose, output
    # lane axis = hidden. Zero padding is matmul-safe.
    x_p = _pad2(x.astype(in_dtype), B_p, K_p)
    w_p = _pad2(weights.T.astype(in_dtype), K_p, H_p)
    b_p = _pad2(bias.reshape(1, H).astype(jnp.float32), 1, H_p)
    v_p = _pad2(v_state.astype(out_dtype), B_p, H_p)

    grid = (B_p // tm, H_p // tn, K_p // tk)

    itm = jnp.dtype(in_dtype).itemsize
    otm = jnp.dtype(out_dtype).itemsize
    flops = 2 * B_p * H_p * K_p
    bytes_accessed = (x_p.size * itm + w_p.size * itm + b_p.size * 4
                      + B_p * H_p * otm           # v in
                      + 2 * B_p * H_p * otm)      # v_new + i_new out
    # Double-buffered x/w/v/bias tiles + double-buffered outputs + f32 acc.
    vmem_need = (2 * (tm * tk + tk * tn) * itm
                 + 2 * (tm * tn + tn) * max(otm, 4)
                 + 2 * 2 * tm * tn * otm
                 + tm * tn * 4)
    vmem_limit = int(min(100 * 1024 * 1024, max(32 * 1024 * 1024, 2 * vmem_need)))

    grid_spec = pltpu.PrefetchScalarGridSpec(
        num_scalar_prefetch=0,
        grid=grid,
        in_specs=[
            pl.BlockSpec((tm, tk), lambda i, j, k: (i, k)),   # x tile
            pl.BlockSpec((tk, tn), lambda i, j, k: (k, j)),   # W^T tile (lane-dense)
            pl.BlockSpec((1, tn), lambda i, j, k: (0, j)),    # bias tile
            pl.BlockSpec((tm, tn), lambda i, j, k: (i, j)),   # previous v tile
        ],
        out_specs=[
            pl.BlockSpec((tm, tn), lambda i, j, k: (i, j)),   # v_new
            pl.BlockSpec((tm, tn), lambda i, j, k: (i, j)),   # i_new
        ],
        scratch_shapes=[pltpu.VMEM((tm, tn), jnp.float32)],   # f32 accumulator
    )

    v_new_p, i_new_p = pl.pallas_call(
        _make_li_kernel(float(tau_mem)),
        out_shape=(jax.ShapeDtypeStruct((B_p, H_p), out_dtype),
                   jax.ShapeDtypeStruct((B_p, H_p), out_dtype)),
        grid_spec=grid_spec,
        compiler_params=pltpu.CompilerParams(
            dimension_semantics=("parallel", "parallel", "arbitrary"),
            vmem_limit_bytes=vmem_limit),
        cost_estimate=pl.CostEstimate(flops=flops, transcendentals=0,
                                      bytes_accessed=bytes_accessed),
        # v_new writes in place over the (padded) state buffer.
        input_output_aliases={3: 0},
    )(x_p, w_p, b_p, v_p)

    v_new = v_new_p[:B, :H]
    i_new = i_new_p[:B, :H]
    # TODO(synk): for multi-timestep use, fold the time loop into the kernel
    # (extra "arbitrary" grid axis, W index_map -> (0, 0)) so W stays VMEM-resident.
    return v_new, (v_new, i_new)


def init_params(key, input_size, hidden_size):
    """Deterministic init mirroring reset_parameters():
    kaiming_uniform_(a=sqrt(5)) on W  -> U(-1/sqrt(fan_in), 1/sqrt(fan_in))
    bias -> U(-1/sqrt(fan_in), 1/sqrt(fan_in)).
    """
    kw, kb = jax.random.split(key)
    fan_in = input_size
    bound = 1.0 / math.sqrt(fan_in)
    w = jax.random.uniform(kw, (hidden_size, input_size), jnp.float32, -bound, bound)
    b = jax.random.uniform(kb, (hidden_size,), jnp.float32, -bound, bound)
    return w, b


if __name__ == "__main__":
    key = jax.random.PRNGKey(0)
    k_in, k_param = jax.random.split(key)

    batch, input_size, hidden_size = 2, 16, 32
    x = jax.random.normal(k_in, (batch, input_size), jnp.float32)
    weights, bias = init_params(k_param, input_size, hidden_size)

    # state is None in the module's forward -> v = v_leak, i = zeros
    v0 = jnp.full((batch, hidden_size), V_LEAK, dtype=jnp.float32)

    step = jax.jit(functools.partial(li_linear_cell, tau_mem=TAU_MEM))
    v_new, (v_state, i_state) = step(x, weights, bias, v0)
    jax.block_until_ready((v_new, v_state, i_state))

    # Reference check in plain JAX.
    i_ref = x @ weights.T
    v_ref = TAU_MEM * v0 + i_ref + bias[None, :]
    assert jnp.allclose(v_new, v_ref, atol=1e-5), "v mismatch"
    assert jnp.allclose(i_state, i_ref, atol=1e-5), "i mismatch"
    assert jnp.allclose(v_state, v_ref, atol=1e-5), "v state mismatch"

    print("KERNEL_OK")
</pallas_src>

<mosaic_0001>
module attributes {stable_mosaic.version = 11 : i64} {
  func.func @li_linear_kernel(%arg0: i32, %arg1: i32, %arg2: i32, %arg3: memref<8x128xf32, #tpu.memory_space<vmem>>, %arg4: memref<128x128xf32, #tpu.memory_space<vmem>>, %arg5: memref<1x128xf32, #tpu.memory_space<vmem>>, %arg6: memref<8x128xf32, #tpu.memory_space<vmem>>, %arg7: memref<8x128xf32, #tpu.memory_space<vmem>>, %arg8: memref<8x128xf32, #tpu.memory_space<vmem>>, %arg9: memref<8x128xf32, #tpu.memory_space<vmem>>) attributes {dimension_semantics = [#tpu.dimension_semantics<parallel>, #tpu.dimension_semantics<parallel>, #tpu.dimension_semantics<arbitrary>], iteration_bounds = array<i64: 1, 1, 1>, scalar_prefetch = 0 : i64, scratch_operands = 1 : i64, tpu.core_type = #tpu.core_type<tc>, window_params = [{transform_indices = @transform_0, window_bounds = array<i64: 8, 128>}, {transform_indices = @transform_1, window_bounds = array<i64: 128, 128>}, {transform_indices = @transform_2, window_bounds = array<i64: 1, 128>}, {transform_indices = @transform_3, window_bounds = array<i64: 8, 128>}, {transform_indices = @transform_4, window_bounds = array<i64: 8, 128>}, {transform_indices = @transform_5, window_bounds = array<i64: 8, 128>}]} {
    %c0_i32 = arith.constant 0 : i32
    %0 = arith.cmpi eq, %arg2, %c0_i32 : i32
    %1 = arith.extui %0 : i1 to i32
    %c0_i32_0 = arith.constant 0 : i32
    %2 = arith.cmpi ne, %1, %c0_i32_0 : i32
    scf.if %2 {
      %cst_10 = arith.constant 0.000000e+00 : f32
      %12 = vector.broadcast %cst_10 : f32 to vector<8x128xf32>
      %c0_11 = arith.constant 0 : index
      %c0_12 = arith.constant 0 : index
      %13 = vector.load %arg9[%c0_11, %c0_12] : memref<8x128xf32, #tpu.memory_space<vmem>>, vector<8x128xf32>
      tpu.vector_store %arg9[%c0_11, %c0_12], %12 {strides = array<i32>} : memref<8x128xf32, #tpu.memory_space<vmem>>, vector<8x128xf32>,
    } else {
    }
    %c0 = arith.constant 0 : index
    %c0_1 = arith.constant 0 : index
    %3 = vector.load %arg9[%c0, %c0_1] : memref<8x128xf32, #tpu.memory_space<vmem>>, vector<8x128xf32>
    %c0_2 = arith.constant 0 : index
    %c0_3 = arith.constant 0 : index
    %4 = vector.load %arg3[%c0_2, %c0_3] : memref<8x128xf32, #tpu.memory_space<vmem>>, vector<8x128xf32>
    %c0_4 = arith.constant 0 : index
    %c0_5 = arith.constant 0 : index
    %5 = vector.load %arg4[%c0_4, %c0_5] : memref<128x128xf32, #tpu.memory_space<vmem>>, vector<128x128xf32>
    %cst = arith.constant dense<0.000000e+00> : vector<8x128xf32>
    %6 = tpu.matmul %4, %5, %cst {dimension_numbers = #tpu.dot_dimension_numbers<[1], [0], [0], [1], [0, 0, 1, 1], [], []>} : vector<8x128xf32>, vector<128x128xf32>, vector<8x128xf32> -> vector<8x128xf32>
    %7 = arith.addf %3, %6 : vector<8x128xf32>
    %c0_6 = arith.constant 0 : index
    %c0_7 = arith.constant 0 : index
    %8 = vector.load %arg9[%c0_6, %c0_7] : memref<8x128xf32, #tpu.memory_space<vmem>>, vector<8x128xf32>
    tpu.vector_store %arg9[%c0_6, %c0_7], %7 {strides = array<i32>} : memref<8x128xf32, #tpu.memory_space<vmem>>, vector<8x128xf32>,
    %c0_i32_8 = arith.constant 0 : i32
    %9 = arith.cmpi eq, %arg2, %c0_i32_8 : i32
    %10 = arith.extui %9 : i1 to i32
    %c0_i32_9 = arith.constant 0 : i32
    %11 = arith.cmpi ne, %10, %c0_i32_9 : i32
    scf.if %11 {
      %c0_10 = arith.constant 0 : index
      %c0_11 = arith.constant 0 : index
      %12 = vector.load %arg9[%c0_10, %c0_11] : memref<8x128xf32, #tpu.memory_space<vmem>>, vector<8x128xf32>
      %c0_12 = arith.constant 0 : index
      %c0_13 = arith.constant 0 : index
      %13 = vector.load %arg6[%c0_12, %c0_13] : memref<8x128xf32, #tpu.memory_space<vmem>>, vector<8x128xf32>
      %cst_14 = arith.constant 0.899999976 : f32
      %14 = vector.broadcast %cst_14 : f32 to vector<8x128xf32>
      %15 = arith.mulf %14, %13 : vector<8x128xf32>
      %16 = arith.addf %15, %12 : vector<8x128xf32>
      %c0_15 = arith.constant 0 : index
      %c0_16 = arith.constant 0 : index
      %17 = vector.load %arg5[%c0_15, %c0_16] : memref<1x128xf32, #tpu.memory_space<vmem>>, vector<1x128xf32>
      %18 = vector.broadcast %17 : vector<1x128xf32> to vector<8x128xf32>
      %19 = arith.addf %16, %18 : vector<8x128xf32>
      %c0_17 = arith.constant 0 : index
      %c0_18 = arith.constant 0 : index
      %20 = vector.load %arg8[%c0_17, %c0_18] : memref<8x128xf32, #tpu.memory_space<vmem>>, vector<8x128xf32>
      tpu.vector_store %arg8[%c0_17, %c0_18], %12 {strides = array<i32>} : memref<8x128xf32, #tpu.memory_space<vmem>>, vector<8x128xf32>,
      %c0_19 = arith.constant 0 : index
      %c0_20 = arith.constant 0 : index
      %21 = vector.load %arg7[%c0_19, %c0_20] : memref<8x128xf32, #tpu.memory_space<vmem>>, vector<8x128xf32>
      tpu.vector_store %arg7[%c0_19, %c0_20], %19 {strides = array<i32>} : memref<8x128xf32, #tpu.memory_space<vmem>>, vector<8x128xf32>,
    } else {
    }
    return
  }
  func.func @transform_0(%arg0: i32, %arg1: i32, %arg2: i32) -> (i32, i32) {
    %c0_i32 = arith.constant 0 : i32
    return %arg0, %arg2 : i32, i32
  }
  func.func @transform_1(%arg0: i32, %arg1: i32, %arg2: i32) -> (i32, i32) {
    %c0_i32 = arith.constant 0 : i32
    return %arg2, %arg1 : i32, i32
  }
  func.func @transform_2(%arg0: i32, %arg1: i32, %arg2: i32) -> (i32, i32) {
    %c0_i32 = arith.constant 0 : i32
    %c0_i32_0 = arith.constant 0 : i32
    return %c0_i32, %arg1 : i32, i32
  }
  func.func @transform_3(%arg0: i32, %arg1: i32, %arg2: i32) -> (i32, i32) {
    %c0_i32 = arith.constant 0 : i32
    return %arg0, %arg1 : i32, i32
  }
  func.func @transform_4(%arg0: i32, %arg1: i32, %arg2: i32) -> (i32, i32) {
    %c0_i32 = arith.constant 0 : i32
    return %arg0, %arg1 : i32, i32
  }
  func.func @transform_5(%arg0: i32, %arg1: i32, %arg2: i32) -> (i32, i32) {
    %c0_i32 = arith.constant 0 : i32
    return %arg0, %arg1 : i32, i32
  }
}

</mosaic_0001>

<llo_original>
// kernel: li_linear_cell.1
$region0: #{li_linear_cell.1}
  #allocation0 [shape = 'u32[]', space=smem, size = 0x4, offset = 0x4, fixed_abs, tag = 'smem constant byte address 0x4 - core index']
  #allocation1 [shape = 'u32[144,128]{1,0:T(1,128)}', space=vmem, size = 0x12000, scoped, tag = 'internal scratch']
  #allocation2 [shape = 'f32[8,128]{1,0:T(8,128)}', space=vmem, size = 0x1000, scoped, tag = 'scratch operand']
  %s0 = inlined_call_operand.vmem [shape: f32[8,128], index: 0, kind: input, shape index: {}]
  %s1 = inlined_call_operand.vmem [shape: f32[128,128], index: 1, kind: input, shape index: {}]
  %s2 = inlined_call_operand.vmem [shape: f32[1,128], index: 2, kind: input, shape index: {}]
  %s3 = inlined_call_operand.vmem [shape: f32[8,128], index: 3, kind: input, shape index: {}, may-alias: {3,4}]
  %s4 = inlined_call_operand.vmem [shape: f32[8,128], index: 4, kind: output, shape index: {0}, may-alias: {3,4}]
  %s5 = inlined_call_operand.vmem [shape: f32[8,128], index: 5, kind: output, shape index: {1}]
  %6 = xla_tuple %s4, %s5
  %s7 = sld [smem:[#allocation0]]
  $region42: #{li_linear_cell.1} parent=0
    _
  %s9 = ssub.s32 1, %s7
  %s10 = scalar_select 0, %s9, %s7
  // Predicated region
  $region2: #{li_linear_cell.1} parent=0 // pred_check
    _
  $region3: #{li_linear_cell.1} parent=0 // pred_check_branch
    %12 = sbr.rel (0) target = $region5
  $region4: #{li_linear_cell.1} parent=0 // pred_region
    _
  $region5: #{li_linear_cell.1} parent=0 // pred_fallthru
    _
  // Predicated region
  $region6: #{li_linear_cell.1} parent=0 // pred_check
    _
  $region7: #{li_linear_cell.1} parent=0 // pred_check_branch
    %14 = sbr.rel (0) target = $region9
  $region8: #{li_linear_cell.1} parent=0 // pred_region
    _
  $region9: #{li_linear_cell.1} parent=0 // pred_fallthru
    _
  // Predicated region
  $region10: #{li_linear_cell.1} parent=0 // pred_check
    _
  $region11: #{li_linear_cell.1} parent=0 // pred_check_branch
    %16 = sbr.rel (0) target = $region13
  $region12: #{li_linear_cell.1} parent=0 // pred_region
    _
  $region13: #{li_linear_cell.1} parent=0 // pred_fallthru
    _
  // Predicated region
  $region14: #{li_linear_cell.1} parent=0 // pred_check
    _
  $region15: #{li_linear_cell.1} parent=0 // pred_check_branch
    %18 = sbr.rel (0) target = $region17
  $region16: #{li_linear_cell.1} parent=0 // pred_region
    _
  $region17: #{li_linear_cell.1} parent=0 // pred_fallthru
    _
  %p19 = scmp.eq.s32.totalorder 0, 0
  // Predicated region
  $region18: #{li_linear_cell.1} parent=0 // pred_check
    %p20 = pneg %p19
  $region19: #{li_linear_cell.1} parent=0 // pred_check_branch
    %22 = sbr.rel (%p20) target = $region21
  $region20: #{li_linear_cell.1} parent=0 // pred_region
    %23 = vst [vmem:[#allocation2] sm:$0xff] 0.0
  $region21: #{li_linear_cell.1} parent=0 // pred_fallthru
    _
  %v24 = vld [vmem:[#allocation2] sm:$0xff]
  %v25 = vld [vmem:[%s0] sm:$0xff]
  %v26 = vld [vmem:[%s1] sm:$0xff]
  %v27 = vld [vmem:[%s1 + $0x8] sm:$0xff]
  %v28 = vld [vmem:[%s1 + $0x10] sm:$0xff]
  %v29 = vld [vmem:[%s1 + $0x18] sm:$0xff]
  %v30 = vld [vmem:[%s1 + $0x20] sm:$0xff]
  %v31 = vld [vmem:[%s1 + $0x28] sm:$0xff]
  %v32 = vld [vmem:[%s1 + $0x30] sm:$0xff]
  %v33 = vld [vmem:[%s1 + $0x38] sm:$0xff]
  %v34 = vld [vmem:[%s1 + $0x40] sm:$0xff]
  %v35 = vld [vmem:[%s1 + $0x48] sm:$0xff]
  %v36 = vld [vmem:[%s1 + $0x50] sm:$0xff]
  %v37 = vld [vmem:[%s1 + $0x58] sm:$0xff]
  %v38 = vld [vmem:[%s1 + $0x60] sm:$0xff]
  %v39 = vld [vmem:[%s1 + $0x68] sm:$0xff]
  %v40 = vld [vmem:[%s1 + $0x70] sm:$0xff]
  %v41 = vld [vmem:[%s1 + $0x78] sm:$0xff]
  %42 = vmatprep.subr.mxu0 0.0
  %43 = vmatpush1.msra.mxu0 %v26
  %44 = vmatprep.subr.mxu0 0.0
  %45 = vmatpush1.msra.mxu0 %v27
  %46 = vmatprep.subr.mxu0 0.0
  %47 = vmatpush1.msra.mxu0 %v28
  %48 = vmatprep.subr.mxu0 0.0
  %49 = vmatpush1.msra.mxu0 %v29
  %50 = vmatprep.subr.mxu0 0.0
  %51 = vmatpush1.msra.mxu0 %v30
  %52 = vmatprep.subr.mxu0 0.0
  %53 = vmatpush1.msra.mxu0 %v31
  %54 = vmatprep.subr.mxu0 0.0
  %55 = vmatpush1.msra.mxu0 %v32
  %56 = vmatprep.subr.mxu0 0.0
  %57 = vmatpush1.msra.mxu0 %v33
  %58 = vmatprep.subr.mxu0 0.0
  %59 = vmatpush1.msra.mxu0 %v34
  %60 = vmatprep.subr.mxu0 0.0
  %61 = vmatpush1.msra.mxu0 %v35
  %62 = vmatprep.subr.mxu0 0.0
  %63 = vmatpush1.msra.mxu0 %v36
  %64 = vmatprep.subr.mxu0 0.0
  %65 = vmatpush1.msra.mxu0 %v37
  %66 = vmatprep.subr.mxu0 0.0
  %67 = vmatpush1.msra.mxu0 %v38
  %68 = vmatprep.subr.mxu0 0.0
  %69 = vmatpush1.msra.mxu0 %v39
  %70 = vmatprep.subr.mxu0 0.0
  %71 = vmatpush1.msra.mxu0 %v40
  %72 = vmatprep.subr.mxu0 0.0
  %73 = vmatpush1.msra.mxu0 %v41
  %74 = vmatprep.subr.mxu0 0.0
  %75 = vmatpush1.msra.mxu0 0.0
  %76 = vmatprep.subr.mxu0 0.0
  %77 = vmatpush1.msra.mxu0 0.0
  %78 = vmatprep.subr.mxu0 0.0
  %79 = vmatpush1.msra.mxu0 0.0
  %80 = vmatprep.subr.mxu0 0.0
  %81 = vmatpush1.msra.mxu0 0.0
  %82 = vmatprep.subr.mxu0 0.0
  %83 = vmatpush1.msra.mxu0 0.0
  %84 = vmatprep.subr.mxu0 0.0
  %85 = vmatpush1.msra.mxu0 0.0
  %86 = vmatprep.subr.mxu0 0.0
  %87 = vmatpush1.msra.mxu0 0.0
  %88 = vmatprep.subr.mxu0 0.0
  %89 = vmatpush1.msra.mxu0 0.0
  %90 = vmatprep.subr.mxu0 0.0
  %91 = vmatpush1.msra.mxu0 0.0
  %92 = vmatprep.subr.mxu0 0.0
  %93 = vmatpush1.msra.mxu0 0.0
  %94 = vmatprep.subr.mxu0 0.0
  %95 = vmatpush1.msra.mxu0 0.0
  %96 = vmatprep.subr.mxu0 0.0
  %97 = vmatpush1.msra.mxu0 0.0
  %98 = vmatprep.subr.mxu0 0.0
  %99 = vmatpush1.msra.mxu0 0.0
  %100 = vmatprep.subr.mxu0 0.0
  %101 = vmatpush1.msra.mxu0 0.0
  %102 = vmatprep.subr.mxu0 0.0
  %103 = vmatpush1.msra.mxu0 0.0
  %104 = vmatprep.subr.mxu0 0.0
  %105 = vmatpush1.msra.mxu0 0.0
  %106 = vmatprep.mubr.f32.mxu0 0.0
  %107 = vmatmul.mubr.f32.gmra.mrb[0].mxu0 %v25
  %v108 = vpop.f32.mrb[0].mxu0
  %v109 = vadd.f32 0.0, %v108
  %v110 = vpop.f32.mrb[0].mxu0
  %111 = vdwg.mxu0
  %v112 = vadd.f32 %v24, %v109
  %113 = vst [vmem:[#allocation2] sm:$0xff] %v112
  // Predicated region
  $region22: #{li_linear_cell.1} parent=0 // pred_check
    %p114 = pneg %p19
  $region23: #{li_linear_cell.1} parent=0 // pred_check_branch
    %116 = sbr.rel (%p114) target = $region25
  $region24: #{li_linear_cell.1} parent=0 // pred_region
    %v117 = vld [vmem:[#allocation2] sm:$0xff]
    %v118 = vld [vmem:[%s3] sm:$0xff]
    %v119 = vmul.f32 %v118, 0.9
    %v120 = vadd.f32 %v119, %v117
    %v121 = vld [vmem:[%s2] sm:$0x1]
    %v123 = vlaneseq
    %v124 = vshrl.u32 %v123, 7
    %v125 = vsub.s32 0, %v124
    %v126 = vrot.slane %v121, %v125
    %v128 = vadd.f32 %v120, %v126
    %129 = vst [vmem:[%s5] sm:$0xff] %v117
    %130 = vst [vmem:[%s4] sm:$0xff] %v128
  $region25: #{li_linear_cell.1} parent=0 // pred_fallthru
    _
  // Predicated region
  $region26: #{li_linear_cell.1} parent=0 // pred_check
    _
  $region27: #{li_linear_cell.1} parent=0 // pred_check_branch
    %132 = sbr.rel (0) target = $region29
  $region28: #{li_linear_cell.1} parent=0 // pred_region
    _
  $region29: #{li_linear_cell.1} parent=0 // pred_fallthru
    _
  // Predicated region
  $region30: #{li_linear_cell.1} parent=0 // pred_check
    _
  $region31: #{li_linear_cell.1} parent=0 // pred_check_branch
    %134 = sbr.rel (0) target = $region33
  $region32: #{li_linear_cell.1} parent=0 // pred_region
    _
  $region33: #{li_linear_cell.1} parent=0 // pred_fallthru
    _
  // Predicated region
  $region34: #{li_linear_cell.1} parent=0 // pred_check
    _
  $region35: #{li_linear_cell.1} parent=0 // pred_check_branch
    %136 = sbr.rel (0) target = $region37
  $region36: #{li_linear_cell.1} parent=0 // pred_region
    _
  $region37: #{li_linear_cell.1} parent=0 // pred_fallthru
    _
  // Predicated region
  $region38: #{li_linear_cell.1} parent=0 // pred_check
    _
  $region39: #{li_linear_cell.1} parent=0 // pred_check_branch
    %138 = sbr.rel (0) target = $region41
  $region40: #{li_linear_cell.1} parent=0 // pred_region
    _
  $region41: #{li_linear_cell.1} parent=0 // pred_fallthru
    _

</llo_original>
